<compile_context>
chip_gen: v5e
topology: v5e:2x2
jax: 0.10.0
libtpu: 0.0.40
codegen_flags: <defaults>
</compile_context>

<pallas_src>
import jax
import jax.numpy as jnp
from jax.experimental import pallas as pl
from jax.experimental.pallas import tpu as pltpu

KSIZE = 16     # encoder conv kernel size
STRIDE = 8     # encoder conv stride (KSIZE == 2 * STRIDE)
NFILT = 32     # F: encoder emits 2*F channels, mag keeps F
HID = 32       # masker hidden width
NJUDGE = 8     # number of judge embeddings


def _round_up(x, m):
    return ((x + m - 1) // m) * m


def model_e2e_2input_forward(x, judge_id, params):
    """x: (B, L) or (B, 1, L) float32 waveform; judge_id: (B,) int32 -> (B, 1) MOS."""
    if x.ndim == 2:                       # matches `x = x.unsqueeze(1)`
        x = x[:, None, :]
    B, _, L = x.shape
    assert L >= KSIZE
    T = (L - KSIZE) // STRIDE + 1         # conv output length (VALID padding);
    inv_t = 1.0 / T                       # trailing partial frame is dropped (Conv1d semantics)

    # Time tiling: lane axis padded to a multiple of 128, at most 2048 frames/tile.
    t_pad128 = _round_up(T, 128)
    t_tile = min(t_pad128, 2048)
    nt = -(-t_pad128 // t_tile)
    t_pad = nt * t_tile

    enc_w, enc_b, judge_table, w1, b1, w2, b2 = params
    # enc_w is (2F, K) == PyTorch Conv1d weight (2F, 1, K) squeezed; any torch
    # import must drop the in-channel dim (no transpose needed in this layout).
    enc_b_col = enc_b.reshape(2 * NFILT, 1)
    table_t = judge_table.T                      # (F, NJUDGE)
    b1_row = b1.reshape(1, HID)
    w2_row = w2.reshape(1, HID)                  # (H,1) -> (1,H)
    b2_mat = b2.reshape(1, 1)

    # frames^T[b, k, t] = x[b, 0, t*S + k].  K == 2*S, so frame t is simply
    # [chunk t, chunk t+1] with chunk p = x[p*S:(p+1)*S]; built once, lane-dense.
    tp = T + 1
    chunks = x[:, 0, :tp * STRIDE].reshape(B, tp, STRIDE)            # (B, Tp, S)
    frames = jnp.concatenate([chunks[:, :T, :], chunks[:, 1:, :]], axis=-1)  # (B, T, K)
    frames_t = jnp.swapaxes(frames, 1, 2)                            # (B, K, T)
    frames_t = jnp.pad(frames_t, ((0, 0), (0, 0), (0, t_pad - T)))   # (B, K, T_pad)

    judge_id = judge_id.astype(jnp.int32)

    def kernel(jid_ref, fr_ref, w_ref, bcol_ref, tab_ref, w1_ref, b1_ref,
               w2_ref, b2_ref, out_ref, acc_ref):
        # fr_ref: (K, TT)  w_ref: (2F, K)  bcol_ref: (2F, 1)  tab_ref: (F, NJUDGE)
        # w1_ref: (F, H)   b1/w2: (1, H)   b2: (1, 1)   out_ref: (1, 128)
        # acc_ref: (F, 1) pooled-sum accumulator (persists across the T grid axis)
        b = pl.program_id(0)
        t = pl.program_id(1)

        @pl.when(t == 0)
        def _():
            acc_ref[...] = jnp.zeros_like(acc_ref)

        # Conv1d(1, 2F, K, stride=S) as ONE transposed matmul: (2F,K) @ (K,TT).
        z = jnp.dot(w_ref[...], fr_ref[...],
                    preferred_element_type=jnp.float32) + bcol_ref[...]   # (2F, TT)
        re = z[:NFILT, :]                               # 8-aligned sublane slices
        im = z[NFILT:, :]
        tf_mag = jnp.sqrt(re * re + im * im)            # (F, TT), lane-dense

        # Mask padded frames, accumulate pooled sum over time (lane reduce).
        lane = jax.lax.broadcasted_iota(jnp.int32, (1, t_tile), 1) + t * t_tile
        valid = (lane < T).astype(jnp.float32)
        acc_ref[...] += jnp.sum(tf_mag * valid, axis=-1, keepdims=True)   # (F, 1)

        @pl.when(t == pl.num_programs(1) - 1)
        def _():
            # In-kernel judge lookup: one-hot over the 8-wide judge lane axis.
            jid = jid_ref[b]
            onehot = jax.lax.broadcasted_iota(jnp.int32, (NFILT, NJUDGE), 1) == jid
            emb_col = jnp.sum(jnp.where(onehot, tab_ref[...], 0.0),
                              axis=-1, keepdims=True)                     # (F, 1)
            feat = acc_ref[...] * inv_t + emb_col                         # (F, 1)
            # Layer 1 on the VPU: (F,1)*(F,H) -> sublane reduce -> (1,H).
            h = jnp.sum(feat * w1_ref[...], axis=0, keepdims=True) + b1_ref[...]
            h = jnp.maximum(h, 0.0)
            # Layer 2: VPU multiply + lane reduce (no N=1 MXU pass).
            mos = jnp.sum(h * w2_ref[...], axis=-1, keepdims=True) + b2_ref[...]
            out_ref[...] = jnp.broadcast_to(mos, out_ref.shape)           # lane-dense

    grid_spec = pltpu.PrefetchScalarGridSpec(
        num_scalar_prefetch=1,                       # judge_id -> SMEM
        grid=(B, nt),
        in_specs=[
            pl.BlockSpec((None, KSIZE, t_tile), lambda b, t, jid: (b, 0, t)),  # frames^T
            pl.BlockSpec((2 * NFILT, KSIZE), lambda b, t, jid: (0, 0)),        # enc_w
            pl.BlockSpec((2 * NFILT, 1), lambda b, t, jid: (0, 0)),            # enc_b col
            pl.BlockSpec((NFILT, NJUDGE), lambda b, t, jid: (0, 0)),           # judge table^T
            pl.BlockSpec((NFILT, HID), lambda b, t, jid: (0, 0)),              # w1
            pl.BlockSpec((1, HID), lambda b, t, jid: (0, 0)),                  # b1
            pl.BlockSpec((1, HID), lambda b, t, jid: (0, 0)),                  # w2 row
            pl.BlockSpec((1, 1), lambda b, t, jid: (0, 0)),                    # b2
        ],
        out_specs=pl.BlockSpec((None, 1, 128), lambda b, t, jid: (b, 0, 0)),
        scratch_shapes=[pltpu.VMEM((NFILT, 1), jnp.float32)],
    )

    out = pl.pallas_call(
        kernel,
        out_shape=jax.ShapeDtypeStruct((B, 1, 128), jnp.float32),
        grid_spec=grid_spec,
        compiler_params=pltpu.CompilerParams(
            dimension_semantics=("parallel", "arbitrary")),
    )(judge_id, frames_t, enc_w, enc_b_col, table_t, w1, b1_row, w2_row, b2_mat)

    return out[:, 0, :1]                                                   # (B, 1)


def init_params(key):
    k = jax.random.split(key, 7)
    enc_w = jax.random.normal(k[0], (2 * NFILT, KSIZE), jnp.float32) * 0.1
    enc_b = jax.random.normal(k[1], (2 * NFILT,), jnp.float32) * 0.01
    judge_table = jax.random.normal(k[2], (NJUDGE, NFILT), jnp.float32) * 0.1
    w1 = jax.random.normal(k[3], (NFILT, HID), jnp.float32) * 0.1
    b1 = jax.random.normal(k[4], (HID,), jnp.float32) * 0.01
    w2 = jax.random.normal(k[5], (HID, 1), jnp.float32) * 0.1
    b2 = jax.random.normal(k[6], (1,), jnp.float32) * 0.01
    return (enc_w, enc_b, judge_table, w1, b1, w2, b2)


def reference_forward(x, judge_id, params):
    """Pure-JAX reference (matches the PyTorch forward)."""
    if x.ndim == 2:
        x = x[:, None, :]
    enc_w, enc_b, judge_table, w1, b1, w2, b2 = params
    tf = jax.lax.conv_general_dilated(
        x, enc_w[:, None, :], window_strides=(STRIDE,), padding="VALID",
        dimension_numbers=("NCH", "OIH", "NCH")) + enc_b[None, :, None]
    mag = jnp.sqrt(tf[:, :NFILT, :] ** 2 + tf[:, NFILT:, :] ** 2)   # (B, F, T)
    pooled = jnp.mean(mag, axis=-1)                                  # (B, F)
    feat = pooled + judge_table[judge_id]                            # (B, F)
    h = jnp.maximum(feat @ w1 + b1[None, :], 0.0)
    return h @ w2 + b2[None, :]                                      # (B, 1)


if __name__ == "__main__":
    key = jax.random.PRNGKey(0)
    kx, kp = jax.random.split(key)

    B, L = 2, 128
    x = jax.random.normal(kx, (B, 1, L), jnp.float32)        # (B, 1, L) waveform
    judge_id = jnp.array([1, 3], dtype=jnp.int32)            # (B,) judge ids
    params = init_params(kp)

    mos = model_e2e_2input_forward(x, judge_id, params)
    mos = jax.block_until_ready(mos)
    assert mos.shape == (B, 1) and mos.dtype == jnp.float32

    ref = reference_forward(x, judge_id, params)
    assert jnp.allclose(mos, ref, rtol=1e-3, atol=1e-3), (mos, ref)
    print("KERNEL_OK")
</pallas_src>

<mosaic_0001>
module attributes {stable_mosaic.version = 11 : i64} {
  func.func @kernel(%arg0: i32, %arg1: i32, %arg2: memref<2xi32, #tpu.memory_space<smem>>, %arg3: memref<1x16x128xf32, #tpu.memory_space<vmem>>, %arg4: memref<64x16xf32, #tpu.memory_space<vmem>>, %arg5: memref<64x1xf32, #tpu.memory_space<vmem>>, %arg6: memref<32x8xf32, #tpu.memory_space<vmem>>, %arg7: memref<32x32xf32, #tpu.memory_space<vmem>>, %arg8: memref<1x32xf32, #tpu.memory_space<vmem>>, %arg9: memref<1x32xf32, #tpu.memory_space<vmem>>, %arg10: memref<1x1xf32, #tpu.memory_space<vmem>>, %arg11: memref<1x1x128xf32, #tpu.memory_space<vmem>>, %arg12: memref<32x1xf32, #tpu.memory_space<vmem>>) attributes {dimension_semantics = [#tpu.dimension_semantics<parallel>, #tpu.dimension_semantics<arbitrary>], iteration_bounds = array<i64: 2, 1>, scalar_prefetch = 1 : i64, scratch_operands = 1 : i64, tpu.core_type = #tpu.core_type<tc>, window_params = [{transform_indices = @transform_0, window_bounds = array<i64: 1, 16, 128>}, {pipeline_mode = #tpu.pipeline_mode<synchronous>, transform_indices = @transform_1, window_bounds = array<i64: 64, 16>}, {pipeline_mode = #tpu.pipeline_mode<synchronous>, transform_indices = @transform_2, window_bounds = array<i64: 64, 1>}, {pipeline_mode = #tpu.pipeline_mode<synchronous>, transform_indices = @transform_3, window_bounds = array<i64: 32, 8>}, {pipeline_mode = #tpu.pipeline_mode<synchronous>, transform_indices = @transform_4, window_bounds = array<i64: 32, 32>}, {pipeline_mode = #tpu.pipeline_mode<synchronous>, transform_indices = @transform_5, window_bounds = array<i64: 1, 32>}, {pipeline_mode = #tpu.pipeline_mode<synchronous>, transform_indices = @transform_6, window_bounds = array<i64: 1, 32>}, {pipeline_mode = #tpu.pipeline_mode<synchronous>, transform_indices = @transform_7, window_bounds = array<i64: 1, 1>}, {transform_indices = @transform_8, window_bounds = array<i64: 1, 1, 128>}]} {
    %c0_i32 = arith.constant 0 : i32
    %0 = arith.cmpi eq, %arg1, %c0_i32 : i32
    %1 = arith.extui %0 : i1 to i32
    %c0_i32_0 = arith.constant 0 : i32
    %2 = arith.cmpi ne, %1, %c0_i32_0 : i32
    scf.if %2 {
      %cst_14 = arith.constant 0.000000e+00 : f32
      %34 = vector.broadcast %cst_14 : f32 to vector<32x1xf32>
      %c0_15 = arith.constant 0 : index
      %c0_16 = arith.constant 0 : index
      %35 = vector.load %arg12[%c0_15, %c0_16] : memref<32x1xf32, #tpu.memory_space<vmem>>, vector<32x1xf32>
      tpu.vector_store %arg12[%c0_15, %c0_16], %34 {strides = array<i32>} : memref<32x1xf32, #tpu.memory_space<vmem>>, vector<32x1xf32>,
    } else {
    }
    %c0 = arith.constant 0 : index
    %c0_1 = arith.constant 0 : index
    %3 = vector.load %arg4[%c0, %c0_1] : memref<64x16xf32, #tpu.memory_space<vmem>>, vector<64x16xf32>
    %c0_2 = arith.constant 0 : index
    %c0_3 = arith.constant 0 : index
    %c0_4 = arith.constant 0 : index
    %4 = vector.load %arg3[%c0_2, %c0_3, %c0_4] : memref<1x16x128xf32, #tpu.memory_space<vmem>>, vector<1x16x128xf32>
    %5 = vector.shape_cast %4 : vector<1x16x128xf32> to vector<16x128xf32>
    %cst = arith.constant dense<0.000000e+00> : vector<64x128xf32>
    %6 = tpu.matmul %3, %5, %cst {dimension_numbers = #tpu.dot_dimension_numbers<[1], [0], [0], [1], [0, 0, 1, 1], [], []>} : vector<64x16xf32>, vector<16x128xf32>, vector<64x128xf32> -> vector<64x128xf32>
    %c0_5 = arith.constant 0 : index
    %c0_6 = arith.constant 0 : index
    %7 = vector.load %arg5[%c0_5, %c0_6] : memref<64x1xf32, #tpu.memory_space<vmem>>, vector<64x1xf32>
    %8 = vector.broadcast %7 : vector<64x1xf32> to vector<64x128xf32>
    %9 = arith.addf %6, %8 : vector<64x128xf32>
    %10 = vector.extract_strided_slice %9 {offsets = [0, 0], sizes = [32, 128], strides = [1, 1]} : vector<64x128xf32> to vector<32x128xf32>
    %11 = vector.extract_strided_slice %9 {offsets = [32, 0], sizes = [32, 128], strides = [1, 1]} : vector<64x128xf32> to vector<32x128xf32>
    %12 = arith.mulf %10, %10 : vector<32x128xf32>
    %13 = arith.mulf %11, %11 : vector<32x128xf32>
    %14 = arith.addf %12, %13 : vector<32x128xf32>
    %15 = math.sqrt %14 : vector<32x128xf32>
    %16 = tpu.iota {dimensions = array<i32: 1>} : vector<1x128xi32>
    %c128_i32 = arith.constant 128 : i32
    %17 = arith.muli %arg1, %c128_i32 : i32
    %18 = vector.broadcast %17 : i32 to vector<1x128xi32>
    %19 = arith.addi %16, %18 : vector<1x128xi32>
    %c15_i32 = arith.constant 15 : i32
    %20 = vector.broadcast %c15_i32 : i32 to vector<1x128xi32>
    %21 = arith.cmpi slt, %19, %20 : vector<1x128xi32>
    %22 = arith.extui %21 : vector<1x128xi1> to vector<1x128xi32>
    %23 = arith.sitofp %22 : vector<1x128xi32> to vector<1x128xf32>
    %c0_7 = arith.constant 0 : index
    %c0_8 = arith.constant 0 : index
    %24 = vector.load %arg12[%c0_7, %c0_8] : memref<32x1xf32, #tpu.memory_space<vmem>>, vector<32x1xf32>
    %25 = vector.broadcast %23 : vector<1x128xf32> to vector<32x128xf32>
    %26 = arith.mulf %15, %25 : vector<32x128xf32>
    %cst_9 = arith.constant dense<0.000000e+00> : vector<32xf32>
    %27 = vector.multi_reduction <add>, %26, %cst_9 [1] : vector<32x128xf32> to vector<32xf32>
    %28 = vector.shape_cast %27 : vector<32xf32> to vector<32x1xf32>
    %29 = arith.addf %24, %28 : vector<32x1xf32>
    %c0_10 = arith.constant 0 : index
    %c0_11 = arith.constant 0 : index
    %30 = vector.load %arg12[%c0_10, %c0_11] : memref<32x1xf32, #tpu.memory_space<vmem>>, vector<32x1xf32>
    tpu.vector_store %arg12[%c0_10, %c0_11], %29 {strides = array<i32>} : memref<32x1xf32, #tpu.memory_space<vmem>>, vector<32x1xf32>,
    %c0_i32_12 = arith.constant 0 : i32
    %31 = arith.cmpi eq, %arg1, %c0_i32_12 : i32
    %32 = arith.extui %31 : i1 to i32
    %c0_i32_13 = arith.constant 0 : i32
    %33 = arith.cmpi ne, %32, %c0_i32_13 : i32
    scf.if %33 {
      %34 = arith.index_cast %arg0 : i32 to index
      %35 = memref.load %arg2[%34] : memref<2xi32, #tpu.memory_space<smem>>
      %36 = tpu.iota {dimensions = array<i32: 1>} : vector<32x8xi32>
      %37 = vector.broadcast %35 : i32 to vector<32x8xi32>
      %38 = arith.cmpi eq, %36, %37 : vector<32x8xi32>
      %c0_14 = arith.constant 0 : index
      %c0_15 = arith.constant 0 : index
      %39 = vector.load %arg6[%c0_14, %c0_15] : memref<32x8xf32, #tpu.memory_space<vmem>>, vector<32x8xf32>
      %cst_16 = arith.constant 0.000000e+00 : f32
      %40 = vector.broadcast %cst_16 : f32 to vector<32x8xf32>
      %41 = arith.select %38, %39, %40 : vector<32x8xi1>, vector<32x8xf32>
      %cst_17 = arith.constant dense<0.000000e+00> : vector<32xf32>
      %42 = vector.multi_reduction <add>, %41, %cst_17 [1] : vector<32x8xf32> to vector<32xf32>
      %43 = vector.shape_cast %42 : vector<32xf32> to vector<32x1xf32>
      %c0_18 = arith.constant 0 : index
      %c0_19 = arith.constant 0 : index
      %44 = vector.load %arg12[%c0_18, %c0_19] : memref<32x1xf32, #tpu.memory_space<vmem>>, vector<32x1xf32>
      %cst_20 = arith.constant 0.0666666701 : f32
      %45 = vector.broadcast %cst_20 : f32 to vector<32x1xf32>
      %46 = arith.mulf %44, %45 : vector<32x1xf32>
      %47 = arith.addf %46, %43 : vector<32x1xf32>
      %c0_21 = arith.constant 0 : index
      %c0_22 = arith.constant 0 : index
      %48 = vector.load %arg7[%c0_21, %c0_22] : memref<32x32xf32, #tpu.memory_space<vmem>>, vector<32x32xf32>
      %49 = vector.broadcast %47 : vector<32x1xf32> to vector<32x32xf32>
      %50 = arith.mulf %49, %48 : vector<32x32xf32>
      %cst_23 = arith.constant dense<0.000000e+00> : vector<32xf32>
      %51 = vector.multi_reduction <add>, %50, %cst_23 [0] : vector<32x32xf32> to vector<32xf32>
      %52 = vector.shape_cast %51 : vector<32xf32> to vector<1x32xf32>
      %c0_24 = arith.constant 0 : index
      %c0_25 = arith.constant 0 : index
      %53 = vector.load %arg8[%c0_24, %c0_25] : memref<1x32xf32, #tpu.memory_space<vmem>>, vector<1x32xf32>
      %54 = arith.addf %52, %53 : vector<1x32xf32>
      %cst_26 = arith.constant 0.000000e+00 : f32
      %55 = vector.broadcast %cst_26 : f32 to vector<1x32xf32>
      %56 = arith.maximumf %54, %55 : vector<1x32xf32>
      %c0_27 = arith.constant 0 : index
      %c0_28 = arith.constant 0 : index
      %57 = vector.load %arg9[%c0_27, %c0_28] : memref<1x32xf32, #tpu.memory_space<vmem>>, vector<1x32xf32>
      %58 = arith.mulf %56, %57 : vector<1x32xf32>
      %cst_29 = arith.constant dense<0.000000e+00> : vector<1xf32>
      %59 = vector.multi_reduction <add>, %58, %cst_29 [1] : vector<1x32xf32> to vector<1xf32>
      %60 = vector.shape_cast %59 : vector<1xf32> to vector<1x1xf32>
      %c0_30 = arith.constant 0 : index
      %c0_31 = arith.constant 0 : index
      %61 = vector.load %arg10[%c0_30, %c0_31] : memref<1x1xf32, #tpu.memory_space<vmem>>, vector<1x1xf32>
      %62 = arith.addf %60, %61 : vector<1x1xf32>
      %63 = vector.shape_cast %62 : vector<1x1xf32> to vector<1x1xf32>
      %64 = vector.broadcast %63 : vector<1x1xf32> to vector<1x128xf32>
      %c0_32 = arith.constant 0 : index
      %c0_33 = arith.constant 0 : index
      %c0_34 = arith.constant 0 : index
      %65 = vector.load %arg11[%c0_32, %c0_33, %c0_34] : memref<1x1x128xf32, #tpu.memory_space<vmem>>, vector<1x1x128xf32>
      %66 = vector.shape_cast %65 : vector<1x1x128xf32> to vector<1x128xf32>
      %67 = vector.shape_cast %64 : vector<1x128xf32> to vector<1x1x128xf32>
      tpu.vector_store %arg11[%c0_32, %c0_33, %c0_34], %67 {strides = array<i32>} : memref<1x1x128xf32, #tpu.memory_space<vmem>>, vector<1x1x128xf32>,
    } else {
    }
    return
  }
  func.func @transform_0(%arg0: i32, %arg1: i32, %arg2: memref<2xi32, #tpu.memory_space<smem>>) -> (i32, i32, i32) {
    %c0_i32 = arith.constant 0 : i32
    %c0_i32_0 = arith.constant 0 : i32
    return %arg0, %c0_i32, %arg1 : i32, i32, i32
  }
  func.func @transform_1(%arg0: i32, %arg1: i32, %arg2: memref<2xi32, #tpu.memory_space<smem>>) -> (i32, i32) {
    %c0_i32 = arith.constant 0 : i32
    %c0_i32_0 = arith.constant 0 : i32
    %c0_i32_1 = arith.constant 0 : i32
    return %c0_i32, %c0_i32_0 : i32, i32
  }
  func.func @transform_2(%arg0: i32, %arg1: i32, %arg2: memref<2xi32, #tpu.memory_space<smem>>) -> (i32, i32) {
    %c0_i32 = arith.constant 0 : i32
    %c0_i32_0 = arith.constant 0 : i32
    %c0_i32_1 = arith.constant 0 : i32
    return %c0_i32, %c0_i32_0 : i32, i32
  }
  func.func @transform_3(%arg0: i32, %arg1: i32, %arg2: memref<2xi32, #tpu.memory_space<smem>>) -> (i32, i32) {
    %c0_i32 = arith.constant 0 : i32
    %c0_i32_0 = arith.constant 0 : i32
    %c0_i32_1 = arith.constant 0 : i32
    return %c0_i32, %c0_i32_0 : i32, i32
  }
  func.func @transform_4(%arg0: i32, %arg1: i32, %arg2: memref<2xi32, #tpu.memory_space<smem>>) -> (i32, i32) {
    %c0_i32 = arith.constant 0 : i32
    %c0_i32_0 = arith.constant 0 : i32
    %c0_i32_1 = arith.constant 0 : i32
    return %c0_i32, %c0_i32_0 : i32, i32
  }
  func.func @transform_5(%arg0: i32, %arg1: i32, %arg2: memref<2xi32, #tpu.memory_space<smem>>) -> (i32, i32) {
    %c0_i32 = arith.constant 0 : i32
    %c0_i32_0 = arith.constant 0 : i32
    %c0_i32_1 = arith.constant 0 : i32
    return %c0_i32, %c0_i32_0 : i32, i32
  }
  func.func @transform_6(%arg0: i32, %arg1: i32, %arg2: memref<2xi32, #tpu.memory_space<smem>>) -> (i32, i32) {
    %c0_i32 = arith.constant 0 : i32
    %c0_i32_0 = arith.constant 0 : i32
    %c0_i32_1 = arith.constant 0 : i32
    return %c0_i32, %c0_i32_0 : i32, i32
  }
  func.func @transform_7(%arg0: i32, %arg1: i32, %arg2: memref<2xi32, #tpu.memory_space<smem>>) -> (i32, i32) {
    %c0_i32 = arith.constant 0 : i32
    %c0_i32_0 = arith.constant 0 : i32
    %c0_i32_1 = arith.constant 0 : i32
    return %c0_i32, %c0_i32_0 : i32, i32
  }
  func.func @transform_8(%arg0: i32, %arg1: i32, %arg2: memref<2xi32, #tpu.memory_space<smem>>) -> (i32, i32, i32) {
    %c0_i32 = arith.constant 0 : i32
    %c0_i32_0 = arith.constant 0 : i32
    %c0_i32_1 = arith.constant 0 : i32
    return %arg0, %c0_i32, %c0_i32_0 : i32, i32, i32
  }
}

</mosaic_0001>

<llo_original>
// kernel: tpu_custom_call.1
$region0: #{tpu_custom_call.1}
  #allocation0 [shape = 'u32[]', space=smem, size = 0x4, offset = 0x4, fixed_abs, tag = 'smem constant byte address 0x4 - core index']
  #allocation1 [shape = 'u32[72,128]{1,0:T(1,128)}', space=vmem, size = 0x9000, scoped, tag = 'internal scratch']
  #allocation2 [shape = 'f32[32,1]{1,0:T(8,128)}', space=vmem, size = 0x4000, scoped, tag = 'scratch operand']
  #allocation3 [shape = 's32[1]{0}', space=sflag, size = 0x4, scoped, tag = 'scoped memory for tpu_custom_call.1']
  #allocation4 [shape = 'u8[512]{0}', space=smem, size = 0x200, scoped, tag = 'prefetched SMEM operand 0']
  #allocation5 [shape = 'f32[1,1]{1,0:T(1,128)S(1)}', space=vmem, size = 0x200, scoped, tag = 'scoped memory for tpu_custom_call.1']
  %s0 = inlined_call_operand.vmem [shape: s32[2], index: 0, kind: input, shape index: {}]
  %s1 = inlined_call_operand.vmem [shape: f32[2,16,128], index: 1, kind: input, shape index: {}]
  %s2 = inlined_call_operand.vmem [shape: f32[64,16], index: 2, kind: input, shape index: {}]
  %s3 = inlined_call_operand.vmem [shape: f32[64,1], index: 3, kind: input, shape index: {}]
  %s4 = inlined_call_operand.vmem [shape: f32[32,8], index: 4, kind: input, shape index: {}]
  %s5 = inlined_call_operand.vmem [shape: f32[32,32], index: 5, kind: input, shape index: {}]
  %s6 = inlined_call_operand.vmem [shape: f32[1,32], index: 6, kind: input, shape index: {}]
  %s7 = inlined_call_operand.vmem [shape: f32[1,32], index: 7, kind: input, shape index: {}]
  %s8 = inlined_call_operand.<no memory space> [shape: f32[1,1], index: 8, kind: input, shape index: {}]
  %s9 = inlined_call_operand.hbm [shape: f32[2,1,128], index: 9, kind: output, shape index: {}]
  %s10 = sld [smem:[#allocation0]]
  $region73: #{tpu_custom_call.1} parent=0
    _
  %s12 = ssub.s32 1, %s10
  %s13 = scalar_select 0, %s12, %s10
  %s15 = sshll.u32 %s0, 4
  %s16 = int_to_ptr.vmem [resolvable:$true] %s15
  %18 = dma.vmem_to_smem %s16, 16, [#allocation4], [#allocation3]
  %v19 = vstv %s8
  %20 = vst [vmem:[#allocation5] sm:$0x1] %v19
  %22 = dma.done [#allocation3], 16
  %23 = sfence
  $region1: #{tpu_custom_call.1} parent=0
    #allocation6 [shape = 'u8[1024]{0}', space=vmem, size = 0x400, scoped, tag = 'output window, operand 0']
    #allocation7 [shape = 's32[2]{0}', space=sflag, size = 0x8, scoped, tag = 'scoped memory for tpu_custom_call.1']
    %24 = vsyncpa [#allocation7], 0
    %s25 = scalar_lea.sflag [#allocation7], 1
    %26 = vsyncpa %s25, 0
    loop: start=0, step=1, limit=4
    $region2: #{tpu_custom_call.1} parent=1 // loop_pre_header
      _
    $region3: #{tpu_custom_call.1} parent=1 // loop_header
      %s28 = sphi 0, %s32
      %p29 = scmp.ge.s32.totalorder %s28, 4
      %s35 = sphi 0, %s47
      %s36 = sphi 0, %s43
      %s37 = sphi 0, %s35
      %s38 = sphi 0, %s36
      %s39 = sphi 0, %s37
      %s40 = sphi 0, %s38
      %s52 = sphi 0, %s54
      %s55 = sphi 0, %s52
      %s56 = sphi 0, %s55
      %s72 = sphi 0, %s56
      %s76 = sphi 0, %s76
      %s78 = sphi 0, %s76
      %s79 = sphi 0, %s78
      %s93 = sphi 0, %s79
      %s97 = sphi 0, %s97
      %s99 = sphi 0, %s97
      %s100 = sphi 0, %s99
      %s114 = sphi 0, %s100
      %s118 = sphi 0, %s118
      %s120 = sphi 0, %s118
      %s121 = sphi 0, %s120
      %s135 = sphi 0, %s121
      %s139 = sphi 0, %s139
      %s141 = sphi 0, %s139
      %s142 = sphi 0, %s141
      %s156 = sphi 0, %s142
      %s160 = sphi 0, %s160
      %s162 = sphi 0, %s160
      %s163 = sphi 0, %s162
      %s177 = sphi 0, %s163
      %s181 = sphi 0, %s181
      %s183 = sphi 0, %s181
      %s184 = sphi 0, %s183
      %s198 = sphi 0, %s184
      %s202 = sphi 0, %s202
      %s204 = sphi 0, %s202
      %s205 = sphi 0, %s204
      %s219 = sphi 0, %s205
      %s225 = sphi 0, %s227
      %s228 = sphi 0, %s225
      %s229 = sphi 0, %s228
      %s245 = sphi 0, %s229
    $region4: #{tpu_custom_call.1} parent=1 // loop_header_branch
      %31 = sbr.rel (%p29) target = $region8
    $region5: #{tpu_custom_call.1} parent=1 // loop_body
      %s33 = ssub.s32 %s28, 1
      %s34 = ssub.s32 %s28, 2
      %s41 = sadd.s32 1, %s36
      %p42 = scmp.ge.s32.totalorder %s41, 1
      %s43 = scalar_select %p42, 0, %s41
      %s44 = sadd.s32 1, %s35
      %s45 = scalar_select %p42, %s44, %s35
      %p46 = scmp.ge.s32.totalorder %s45, 2
      %s47 = scalar_select %p46, 0, %s45
      %s48 = ssub.s32 %s35, %s47
      %s49 = ssub.s32 %s36, %s43
      %s50 = sor.u32 %s48, %s49
      %p51 = scmp.eq.s32.totalorder %s50, 0
      %s53 = sadd.s32 %s52, 1
      %s54 = scalar_select %p51, %s52, %s53
      %p57 = pneg %p51
      %p58 = scmp.eq.s32.totalorder %s28, 1
      %p59 = por %p57, %p58
      %p60 = scmp.ne.s32.totalorder %s52, %s55
      %p61 = scmp.eq.s32.totalorder %s28, 0
      %p62 = por %p60, %p61
      %p63 = scmp.ne.s32.totalorder %s52, %s55
      %p64 = scmp.eq.s32.totalorder %s33, 1
      %p65 = por %p63, %p64
      %p66 = scmp.ne.s32.totalorder %s55, %s56
      %p67 = scmp.eq.s32.totalorder %s33, 0
      %p68 = por %p66, %p67
      %p69 = scmp.ne.s32.totalorder %s55, %s56
      %p70 = scmp.eq.s32.totalorder %s34, 1
      %p71 = por %p69, %p70
      %p73 = scmp.ne.s32.totalorder %s56, %s72
      %p74 = scmp.eq.s32.totalorder %s34, 0
      %p75 = por %p73, %p74
      %s77 = sadd.s32 %s76, 1
      %p80 = scmp.eq.s32.totalorder %s28, 1
      %p81 = scmp.ne.s32.totalorder %s76, %s78
      %p82 = scmp.eq.s32.totalorder %s28, 0
      %p83 = por %p81, %p82
      %p84 = scmp.ne.s32.totalorder %s76, %s78
      %p85 = scmp.eq.s32.totalorder %s33, 1
      %p86 = por %p84, %p85
      %p87 = scmp.ne.s32.totalorder %s78, %s79
      %p88 = scmp.eq.s32.totalorder %s33, 0
      %p89 = por %p87, %p88
      %p90 = scmp.ne.s32.totalorder %s78, %s79
      %p91 = scmp.eq.s32.totalorder %s34, 1
      %p92 = por %p90, %p91
      %p94 = scmp.ne.s32.totalorder %s79, %s93
      %p95 = scmp.eq.s32.totalorder %s34, 0
      %p96 = por %p94, %p95
      %s98 = sadd.s32 %s97, 1
      %p101 = scmp.eq.s32.totalorder %s28, 1
      %p102 = scmp.ne.s32.totalorder %s97, %s99
      %p103 = scmp.eq.s32.totalorder %s28, 0
      %p104 = por %p102, %p103
      %p105 = scmp.ne.s32.totalorder %s97, %s99
      %p106 = scmp.eq.s32.totalorder %s33, 1
      %p107 = por %p105, %p106
      %p108 = scmp.ne.s32.totalorder %s99, %s100
      %p109 = scmp.eq.s32.totalorder %s33, 0
      %p110 = por %p108, %p109
      %p111 = scmp.ne.s32.totalorder %s99, %s100
      %p112 = scmp.eq.s32.totalorder %s34, 1
      %p113 = por %p111, %p112
      %p115 = scmp.ne.s32.totalorder %s100, %s114
      %p116 = scmp.eq.s32.totalorder %s34, 0
      %p117 = por %p115, %p116
      %s119 = sadd.s32 %s118, 1
      %p122 = scmp.eq.s32.totalorder %s28, 1
      %p123 = scmp.ne.s32.totalorder %s118, %s120
      %p124 = scmp.eq.s32.totalorder %s28, 0
      %p125 = por %p123, %p124
      %p126 = scmp.ne.s32.totalorder %s118, %s120
      %p127 = scmp.eq.s32.totalorder %s33, 1
      %p128 = por %p126, %p127
      %p129 = scmp.ne.s32.totalorder %s120, %s121
      %p130 = scmp.eq.s32.totalorder %s33, 0
      %p131 = por %p129, %p130
      %p132 = scmp.ne.s32.totalorder %s120, %s121
      %p133 = scmp.eq.s32.totalorder %s34, 1
      %p134 = por %p132, %p133
      %p136 = scmp.ne.s32.totalorder %s121, %s135
      %p137 = scmp.eq.s32.totalorder %s34, 0
      %p138 = por %p136, %p137
      %s140 = sadd.s32 %s139, 1
      %p143 = scmp.eq.s32.totalorder %s28, 1
      %p144 = scmp.ne.s32.totalorder %s139, %s141
      %p145 = scmp.eq.s32.totalorder %s28, 0
      %p146 = por %p144, %p145
      %p147 = scmp.ne.s32.totalorder %s139, %s141
      %p148 = scmp.eq.s32.totalorder %s33, 1
      %p149 = por %p147, %p148
      %p150 = scmp.ne.s32.totalorder %s141, %s142
      %p151 = scmp.eq.s32.totalorder %s33, 0
      %p152 = por %p150, %p151
      %p153 = scmp.ne.s32.totalorder %s141, %s142
      %p154 = scmp.eq.s32.totalorder %s34, 1
      %p155 = por %p153, %p154
      %p157 = scmp.ne.s32.totalorder %s142, %s156
      %p158 = scmp.eq.s32.totalorder %s34, 0
      %p159 = por %p157, %p158
      %s161 = sadd.s32 %s160, 1
      %p164 = scmp.eq.s32.totalorder %s28, 1
      %p165 = scmp.ne.s32.totalorder %s160, %s162
      %p166 = scmp.eq.s32.totalorder %s28, 0
      %p167 = por %p165, %p166
      %p168 = scmp.ne.s32.totalorder %s160, %s162
      %p169 = scmp.eq.s32.totalorder %s33, 1
      %p170 = por %p168, %p169
      %p171 = scmp.ne.s32.totalorder %s162, %s163
      %p172 = scmp.eq.s32.totalorder %s33, 0
      %p173 = por %p171, %p172
      %p174 = scmp.ne.s32.totalorder %s162, %s163
      %p175 = scmp.eq.s32.totalorder %s34, 1
      %p176 = por %p174, %p175
      %p178 = scmp.ne.s32.totalorder %s163, %s177
      %p179 = scmp.eq.s32.totalorder %s34, 0
      %p180 = por %p178, %p179
      %s182 = sadd.s32 %s181, 1
      %p185 = scmp.eq.s32.totalorder %s28, 1
      %p186 = scmp.ne.s32.totalorder %s181, %s183
      %p187 = scmp.eq.s32.totalorder %s28, 0
      %p188 = por %p186, %p187
      %p189 = scmp.ne.s32.totalorder %s181, %s183
      %p190 = scmp.eq.s32.totalorder %s33, 1
      %p191 = por %p189, %p190
      %p192 = scmp.ne.s32.totalorder %s183, %s184
      %p193 = scmp.eq.s32.totalorder %s33, 0
      %p194 = por %p192, %p193
      %p195 = scmp.ne.s32.totalorder %s183, %s184
      %p196 = scmp.eq.s32.totalorder %s34, 1
      %p197 = por %p195, %p196
      %p199 = scmp.ne.s32.totalorder %s184, %s198
      %p200 = scmp.eq.s32.totalorder %s34, 0
      %p201 = por %p199, %p200
      %s203 = sadd.s32 %s202, 1
      %p206 = scmp.eq.s32.totalorder %s28, 1
      %p207 = scmp.ne.s32.totalorder %s202, %s204
      %p208 = scmp.eq.s32.totalorder %s28, 0
      %p209 = por %p207, %p208
      %p210 = scmp.ne.s32.totalorder %s202, %s204
      %p211 = scmp.eq.s32.totalorder %s33, 1
      %p212 = por %p210, %p211
      %p213 = scmp.ne.s32.totalorder %s204, %s205
      %p214 = scmp.eq.s32.totalorder %s33, 0
      %p215 = por %p213, %p214
      %p216 = scmp.ne.s32.totalorder %s204, %s205
      %p217 = scmp.eq.s32.totalorder %s34, 1
      %p218 = por %p216, %p217
      %p220 = scmp.ne.s32.totalorder %s205, %s219
      %p221 = scmp.eq.s32.totalorder %s34, 0
      %p222 = por %p220, %p221
      %s223 = ssub.s32 %s35, %s47
      %p224 = scmp.eq.s32.totalorder %s223, 0
      %s226 = sadd.s32 %s225, 1
      %s227 = scalar_select %p224, %s225, %s226
      %p230 = pneg %p224
      %p231 = scmp.eq.s32.totalorder %s28, 1
      %p232 = por %p230, %p231
      %p233 = scmp.ne.s32.totalorder %s225, %s228
      %p234 = scmp.eq.s32.totalorder %s28, 0
      %p235 = por %p233, %p234
      %p236 = scmp.ne.s32.totalorder %s225, %s228
      %p237 = scmp.eq.s32.totalorder %s33, 1
      %p238 = por %p236, %p237
      %p239 = scmp.ne.s32.totalorder %s228, %s229
      %p240 = scmp.eq.s32.totalorder %s33, 0
      %p241 = por %p239, %p240
      %p242 = scmp.ne.s32.totalorder %s228, %s229
      %p243 = scmp.eq.s32.totalorder %s34, 1
      %p244 = por %p242, %p243
      %p246 = scmp.ne.s32.totalorder %s229, %s245
      %p247 = scmp.eq.s32.totalorder %s34, 0
      %p248 = por %p246, %p247
      %p249 = scmp.le.s32.totalorder 1, %s28
      %p250 = scmp.lt.s32.totalorder %s28, 3
      %p251 = pnand %p249, %p250
      %p252 = pneg %p251
      // Predicated region
      $region9: #{tpu_custom_call.1} parent=5 // pred_check
        _
      $region10: #{tpu_custom_call.1} parent=5 // pred_check_branch
        %254 = sbr.rel (%p251) target = $region12
      $region11: #{tpu_custom_call.1} parent=5 // pred_region
        %s255 = ssub.s32 %s28, 1
        // Predicated region
        $region13: #{tpu_custom_call.1} parent=11 // pred_check
          %p256 = pneg %p89
        $region14: #{tpu_custom_call.1} parent=11 // pred_check_branch
          %258 = sbr.rel (%p256) target = $region16
        $region15: #{tpu_custom_call.1} parent=11 // pred_region
          _
        $region16: #{tpu_custom_call.1} parent=11 // pred_fallthru
          _
        // Predicated region
        $region17: #{tpu_custom_call.1} parent=11 // pred_check
          %p259 = pneg %p110
        $region18: #{tpu_custom_call.1} parent=11 // pred_check_branch
          %261 = sbr.rel (%p259) target = $region20
        $region19: #{tpu_custom_call.1} parent=11 // pred_region
          _
        $region20: #{tpu_custom_call.1} parent=11 // pred_fallthru
          _
        // Predicated region
        $region21: #{tpu_custom_call.1} parent=11 // pred_check
          %p262 = pneg %p131
        $region22: #{tpu_custom_call.1} parent=11 // pred_check_branch
          %264 = sbr.rel (%p262) target = $region24
        $region23: #{tpu_custom_call.1} parent=11 // pred_region
          _
        $region24: #{tpu_custom_call.1} parent=11 // pred_fallthru
          _
        // Predicated region
        $region25: #{tpu_custom_call.1} parent=11 // pred_check
          %p265 = pneg %p152
        $region26: #{tpu_custom_call.1} parent=11 // pred_check_branch
          %267 = sbr.rel (%p265) target = $region28
        $region27: #{tpu_custom_call.1} parent=11 // pred_region
          _
        $region28: #{tpu_custom_call.1} parent=11 // pred_fallthru
          _
        // Predicated region
        $region29: #{tpu_custom_call.1} parent=11 // pred_check
          %p268 = pneg %p173
        $region30: #{tpu_custom_call.1} parent=11 // pred_check_branch
          %270 = sbr.rel (%p268) target = $region32
        $region31: #{tpu_custom_call.1} parent=11 // pred_region
          _
        $region32: #{tpu_custom_call.1} parent=11 // pred_fallthru
          _
        // Predicated region
        $region33: #{tpu_custom_call.1} parent=11 // pred_check
          %p271 = pneg %p194
        $region34: #{tpu_custom_call.1} parent=11 // pred_check_branch
          %273 = sbr.rel (%p271) target = $region36
        $region35: #{tpu_custom_call.1} parent=11 // pred_region
          _
        $region36: #{tpu_custom_call.1} parent=11 // pred_fallthru
          _
        // Predicated region
        $region37: #{tpu_custom_call.1} parent=11 // pred_check
          %p274 = pneg %p215
        $region38: #{tpu_custom_call.1} parent=11 // pred_check_branch
          %276 = sbr.rel (%p274) target = $region40
        $region39: #{tpu_custom_call.1} parent=11 // pred_region
          _
        $region40: #{tpu_custom_call.1} parent=11 // pred_fallthru
          _
      $region12: #{tpu_custom_call.1} parent=5 // pred_fallthru
        _
      %p277 = scmp.lt.s32.totalorder %s28, 2
      // Predicated region
      $region41: #{tpu_custom_call.1} parent=5 // pred_check
        %p278 = pneg %p277
      $region42: #{tpu_custom_call.1} parent=5 // pred_check_branch
        %280 = sbr.rel (%p278) target = $region44
      $region43: #{tpu_custom_call.1} parent=5 // pred_region
        // Predicated region
        $region45: #{tpu_custom_call.1} parent=43 // pred_check
          %p281 = pneg %p62
        $region46: #{tpu_custom_call.1} parent=43 // pred_check_branch
          %283 = sbr.rel (%p281) target = $region48
        $region47: #{tpu_custom_call.1} parent=43 // pred_region
          %p284 = scmp.lt.s32.totalorder %s35, 1
          %s285 = scalar_select %p284, %s35, 1
          %p286 = scmp.lt.s32.totalorder %s36, 0
          %s287 = scalar_select %p286, %s36, 0
          %s288 = smul.addr %s285, 2
          %s289 = sadd.s32 %s287, %s288
          %s290 = smul.addr %s289, 8
          %s291 = scalar_lea.vmem %s1, %s290
        $region48: #{tpu_custom_call.1} parent=43 // pred_fallthru
          _
      $region44: #{tpu_custom_call.1} parent=5 // pred_fallthru
        _
      %p292 = scmp.le.s32.totalorder 1, %s28
      %p293 = scmp.lt.s32.totalorder %s28, 3
      %p294 = pnand %p292, %p293
      %p295 = pneg %p294
      // Predicated region
      $region49: #{tpu_custom_call.1} parent=5 // pred_check
        _
      $region50: #{tpu_custom_call.1} parent=5 // pred_check_branch
        %297 = sbr.rel (%p294) target = $region52
      $region51: #{tpu_custom_call.1} parent=5 // pred_region
        %s298 = ssub.s32 %s28, 1
        %p299 = scmp.lt.s32.totalorder %s37, 1
        %s300 = scalar_select %p299, %s37, 1
        %p301 = scmp.lt.s32.totalorder %s38, 0
        %s302 = scalar_select %p301, %s38, 0
        %s303 = smul.addr %s300, 2
        %s304 = sadd.s32 %s302, %s303
        %s305 = smul.addr %s304, 8
        %s306 = scalar_lea.vmem %s1, %s305
        %p307 = pneg %p68
        %p308 = pneg %p65
        %p309 = pneg %p89
        %p310 = pneg %p86
        %p311 = pneg %p110
        %p312 = pneg %p107
        %p313 = pneg %p131
        %p314 = pneg %p128
        %p315 = pneg %p152
        %p316 = pneg %p149
        %p317 = pneg %p173
        %p318 = pneg %p170
        %p319 = pneg %p194
        %p320 = pneg %p191
        %p321 = pneg %p215
        %p322 = pneg %p212
        %p323 = pneg %p241
        %p324 = pneg %p238
        %s325 = sand.u32 %s228, 1
        %s326 = scalar_lea.sflag [#allocation7], %s325
        %s327 = sand.u32 %s228, 1
        %s328 = scalar_lea.vmem [#allocation6], %s327
        %p329 = scmp.lt.s32.totalorder %s37, 1
        %s330 = scalar_select %p329, %s37, 1
        %p331 = scmp.lt.s32.totalorder %s38, 0
        %s332 = scalar_select %p331, %s38, 0
        %s333 = smul.addr %s330, 2
        %s334 = sadd.s32 %s332, %s333
        %s335 = smul.addr %s334, 8
        %s336 = scalar_lea.vmem %s1, %s335
        %p337 = scmp.eq.s32.totalorder %s38, 0
        // Predicated region
        $region53: #{tpu_custom_call.1} parent=51 // pred_check
          %p338 = pneg %p337
        $region54: #{tpu_custom_call.1} parent=51 // pred_check_branch
          %340 = sbr.rel (%p338) target = $region56
        $region55: #{tpu_custom_call.1} parent=51 // pred_region
          %vm341 = vcmask 7168
          %342 = vst.msk [vmem:[#allocation2] sm:$0xff] %vm341, 0.0
          %343 = vst.msk [vmem:[#allocation2 + $0x8] sm:$0xff] %vm341, 0.0
          %344 = vst.msk [vmem:[#allocation2 + $0x10] sm:$0xff] %vm341, 0.0
          %345 = vst.msk [vmem:[#allocation2 + $0x18] sm:$0xff] %vm341, 0.0
        $region56: #{tpu_custom_call.1} parent=51 // pred_fallthru
          _
        %v346 = vld [vmem:[%s2] sm:$0xff]
        %v347 = vld [vmem:[%s2 + $0x8] sm:$0xff]
        %v348 = vld [vmem:[%s2 + $0x10] sm:$0xff]
        %v349 = vld [vmem:[%s2 + $0x18] sm:$0xff]
        %v350 = vld [vmem:[%s2 + $0x20] sm:$0xff]
        %v351 = vld [vmem:[%s2 + $0x28] sm:$0xff]
        %v352 = vld [vmem:[%s2 + $0x30] sm:$0xff]
        %v353 = vld [vmem:[%s2 + $0x38] sm:$0xff]
        %v354 = vld [vmem:[%s336] sm:$0xff]
        %v355 = vld [vmem:[%s336 + $0x8] sm:$0xff]
        %v356 = vld [vmem:[%s3] sm:$0xff]
        %v357 = vld [vmem:[%s3 + $0x8] sm:$0xff]
        %v358 = vld [vmem:[%s3 + $0x10] sm:$0xff]
        %v359 = vld [vmem:[%s3 + $0x18] sm:$0xff]
        %v360 = vld [vmem:[%s3 + $0x20] sm:$0xff]
        %v361 = vld [vmem:[%s3 + $0x28] sm:$0xff]
        %v362 = vld [vmem:[%s3 + $0x30] sm:$0xff]
        %v363 = vld [vmem:[%s3 + $0x38] sm:$0xff]
        %365 = vset.pattern.permute.xlu0 0
        %366 = vperm.xlu0 %365, %v356
        %v367 = vpop.permute.xlu0 %366
        %370 = vset.pattern.permute.xlu0 0
        %371 = vperm.xlu0 %370, %v357
        %v372 = vpop.permute.xlu0 %371
        %375 = vset.pattern.permute.xlu0 0
        %376 = vperm.xlu0 %375, %v358
        %v377 = vpop.permute.xlu0 %376
        %380 = vset.pattern.permute.xlu0 0
        %381 = vperm.xlu0 %380, %v359
        %v382 = vpop.permute.xlu0 %381
        %385 = vset.pattern.permute.xlu0 0
        %386 = vperm.xlu0 %385, %v360
        %v387 = vpop.permute.xlu0 %386
        %390 = vset.pattern.permute.xlu0 0
        %391 = vperm.xlu0 %390, %v361
        %v392 = vpop.permute.xlu0 %391
        %395 = vset.pattern.permute.xlu0 0
        %396 = vperm.xlu0 %395, %v362
        %v397 = vpop.permute.xlu0 %396
        %400 = vset.pattern.permute.xlu0 0
        %401 = vperm.xlu0 %400, %v363
        %v402 = vpop.permute.xlu0 %401
        %vm404 = vcmask 130048
        %v406 = vsel %vm404, %v346, 0
        %v409 = vsel %vm404, %v347, 0
        %v412 = vsel %vm404, %v348, 0
        %v415 = vsel %vm404, %v349, 0
        %v418 = vsel %vm404, %v350, 0
        %v421 = vsel %vm404, %v351, 0
        %v424 = vsel %vm404, %v352, 0
        %v427 = vsel %vm404, %v353, 0
        %429 = vmatpush.msra.mxu0 0.0
        %430 = vmatpush.msra.mxu0 0.0
        %431 = vmatpush.msra.mxu0 0.0
        %432 = vmatpush.msra.mxu0 0.0
        %433 = vmatpush.msra.mxu0 0.0
        %434 = vmatpush.msra.mxu0 0.0
        %435 = vmatpush.msra.mxu0 0.0
        %436 = vmatpush.msra.mxu0 0.0
        %437 = vmatpush.msra.mxu0 0.0
        %438 = vmatpush.msra.mxu0 0.0
        %439 = vmatpush.msra.mxu0 0.0
        %440 = vmatpush.msra.mxu0 0.0
        %441 = vmatpush.msra.mxu0 0.0
        %442 = vmatpush.msra.mxu0 0.0
        %443 = vmatpush.msra.mxu0 %v355
        %444 = vmatpush.msra.mxu0 %v354
        %445 = vmatmul.f32.gmra.mxu0 %v406
        %v446 = vpop.f32.mrf.mxu0
        %v447 = vadd.f32 %v367, %v446
        %448 = vmatmul.f32.gmra.mxu0 %v409
        %v449 = vpop.f32.mrf.mxu0
        %v450 = vadd.f32 %v372, %v449
        %451 = vmatmul.f32.gmra.mxu0 %v412
        %v452 = vpop.f32.mrf.mxu0
        %v453 = vadd.f32 %v377, %v452
        %454 = vmatmul.f32.gmra.mxu0 %v415
        %v455 = vpop.f32.mrf.mxu0
        %v456 = vadd.f32 %v382, %v455
        %457 = vmatmul.f32.gmra.mxu0 %v418
        %v458 = vpop.f32.mrf.mxu0
        %v459 = vadd.f32 %v387, %v458
        %460 = vmatmul.f32.gmra.mxu0 %v421
        %v461 = vpop.f32.mrf.mxu0
        %v462 = vadd.f32 %v392, %v461
        %463 = vmatmul.f32.gmra.mxu0 %v424
        %v464 = vpop.f32.mrf.mxu0
        %v465 = vadd.f32 %v397, %v464
        %466 = vmatmul.f32.gmra.mxu0 %v427
        %v467 = vpop.f32.mrf.mxu0
        %v468 = vadd.f32 %v402, %v467
        %469 = vdwg.mxu0
        %v470 = vmul.f32 %v447, %v447
        %v471 = vmul.f32 %v450, %v450
        %v472 = vmul.f32 %v453, %v453
        %v473 = vmul.f32 %v456, %v456
        %v474 = vmul.f32 %v459, %v459
        %v475 = vmul.f32 %v462, %v462
        %v476 = vmul.f32 %v465, %v465
        %v477 = vmul.f32 %v468, %v468
        %v478 = vadd.f32 %v470, %v474
        %v479 = vadd.f32 %v471, %v475
        %v480 = vadd.f32 %v472, %v476
        %v481 = vadd.f32 %v473, %v477
        %v482 = vrsqrt.pop %v478
        %v483 = vmul.f32 %v482, %v478
        %v484 = vmul.f32 %v483, %v482
        %v485 = vmul.f32 0.5, %v484
        %v486 = vsub.f32 1.5, %v485
        %v487 = vmul.f32 %v482, %v486
        %v488 = vmul.f32 %v478, %v487
        %vm489 = vcmp.eq.f32.partialorder %v478, inf
        %v490 = vsel %vm489, %v478, %v488
        %vm491 = vcmp.eq.f32.partialorder %v478, 0.0
        %v492 = vand.u32 %v478, 2147483648
        %v493 = vsel %vm491, %v492, %v490
        %v494 = vrsqrt.pop %v479
        %v495 = vmul.f32 %v494, %v479
        %v496 = vmul.f32 %v495, %v494
        %v497 = vmul.f32 0.5, %v496
        %v498 = vsub.f32 1.5, %v497
        %v499 = vmul.f32 %v494, %v498
        %v500 = vmul.f32 %v479, %v499
        %vm501 = vcmp.eq.f32.partialorder %v479, inf
        %v502 = vsel %vm501, %v479, %v500
        %vm503 = vcmp.eq.f32.partialorder %v479, 0.0
        %v504 = vand.u32 %v479, 2147483648
        %v505 = vsel %vm503, %v504, %v502
        %v506 = vrsqrt.pop %v480
        %v507 = vmul.f32 %v506, %v480
        %v508 = vmul.f32 %v507, %v506
        %v509 = vmul.f32 0.5, %v508
        %v510 = vsub.f32 1.5, %v509
        %v511 = vmul.f32 %v506, %v510
        %v512 = vmul.f32 %v480, %v511
        %vm513 = vcmp.eq.f32.partialorder %v480, inf
        %v514 = vsel %vm513, %v480, %v512
        %vm515 = vcmp.eq.f32.partialorder %v480, 0.0
        %v516 = vand.u32 %v480, 2147483648
        %v517 = vsel %vm515, %v516, %v514
        %v518 = vrsqrt.pop %v481
        %v519 = vmul.f32 %v518, %v481
        %v520 = vmul.f32 %v519, %v518
        %v521 = vmul.f32 0.5, %v520
        %v522 = vsub.f32 1.5, %v521
        %v523 = vmul.f32 %v518, %v522
        %v524 = vmul.f32 %v481, %v523
        %vm525 = vcmp.eq.f32.partialorder %v481, inf
        %v526 = vsel %vm525, %v481, %v524
        %vm527 = vcmp.eq.f32.partialorder %v481, 0.0
        %v528 = vand.u32 %v481, 2147483648
        %v529 = vsel %vm527, %v528, %v526
        %v530 = vlaneseq
        %v531 = vand.u32 %v530, 127
        %s532 = smul.u32 %s38, 128
        %v533 = vstv %s532
        %v534 = vadd.s32 %v531, %v533
        %vm535 = vcmp.lt.s32.totalorder %v534, 15
        %v536 = vsel %vm535, 1, 0
        %v537 = vcvt.s32.f32 %v536
        %v538 = vld [vmem:[#allocation2] sm:$0xff]
        %v539 = vld [vmem:[#allocation2 + $0x8] sm:$0xff]
        %v540 = vld [vmem:[#allocation2 + $0x10] sm:$0xff]
        %v541 = vld [vmem:[#allocation2 + $0x18] sm:$0xff]
        %v542 = vmul.f32 %v493, %v537
        %v543 = vmul.f32 %v505, %v537
        %v544 = vmul.f32 %v517, %v537
        %v545 = vmul.f32 %v529, %v537
        %546 = vadd.xlane.f32.xlu0 %v542
        %v547 = vpop.xlane.xlu0 %546
        %548 = vadd.xlane.f32.xlu0 %v543
        %v549 = vpop.xlane.xlu0 %548
        %550 = vadd.xlane.f32.xlu0 %v544
        %v551 = vpop.xlane.xlu0 %550
        %552 = vadd.xlane.f32.xlu0 %v545
        %v553 = vpop.xlane.xlu0 %552
        %v554 = vadd.f32 %v538, %v547
        %v555 = vadd.f32 %v539, %v549
        %v556 = vadd.f32 %v540, %v551
        %v557 = vadd.f32 %v541, %v553
        %vm558 = vcmask 7168
        %559 = vst.msk [vmem:[#allocation2] sm:$0xff] %vm558, %v554
        %560 = vst.msk [vmem:[#allocation2 + $0x8] sm:$0xff] %vm558, %v555
        %561 = vst.msk [vmem:[#allocation2 + $0x10] sm:$0xff] %vm558, %v556
        %562 = vst.msk [vmem:[#allocation2 + $0x18] sm:$0xff] %vm558, %v557
        // Predicated region
        $region57: #{tpu_custom_call.1} parent=51 // pred_check
          %p563 = pneg %p337
        $region58: #{tpu_custom_call.1} parent=51 // pred_check_branch
          %565 = sbr.rel (%p563) target = $region60
        $region59: #{tpu_custom_call.1} parent=51 // pred_region
          %s566 = sld [smem:[#allocation4 + %s37]]
          %v567 = vstv %s566
          %vm568 = vcmp.eq.s32.totalorder %v531, %v567
          %v569 = vld [vmem:[%s4] sm:$0xff]
          %v570 = vld [vmem:[%s4 + $0x8] sm:$0xff]
          %v571 = vld [vmem:[%s4 + $0x10] sm:$0xff]
          %v572 = vld [vmem:[%s4 + $0x18] sm:$0xff]
          %v573 = vsel %vm568, %v569, 0.0
          %v574 = vsel %vm568, %v570, 0.0
          %v575 = vsel %vm568, %v571, 0.0
          %v576 = vsel %vm568, %v572, 0.0
          %vm577 = vcmask 64512
          %v578 = vsel %vm577, %v573, 0.0
          %579 = vadd.xlane.f32.xlu0 %v578
          %v580 = vpop.xlane.xlu0 %579
          %v581 = vsel %vm577, %v574, 0.0
          %582 = vadd.xlane.f32.xlu0 %v581
          %v583 = vpop.xlane.xlu0 %582
          %v584 = vsel %vm577, %v575, 0.0
          %585 = vadd.xlane.f32.xlu0 %v584
          %v586 = vpop.xlane.xlu0 %585
          %v587 = vsel %vm577, %v576, 0.0
          %588 = vadd.xlane.f32.xlu0 %v587
          %v589 = vpop.xlane.xlu0 %588
          %v590 = vld [vmem:[#allocation2] sm:$0xff]
          %v591 = vld [vmem:[#allocation2 + $0x8] sm:$0xff]
          %v592 = vld [vmem:[#allocation2 + $0x10] sm:$0xff]
          %v593 = vld [vmem:[#allocation2 + $0x18] sm:$0xff]
          %v594 = vmul.f32 %v590, 0.06666667
          %v595 = vmul.f32 %v591, 0.06666667
          %v596 = vmul.f32 %v592, 0.06666667
          %v597 = vmul.f32 %v593, 0.06666667
          %v598 = vadd.f32 %v594, %v580
          %v599 = vadd.f32 %v595, %v583
          %v600 = vadd.f32 %v596, %v586
          %v601 = vadd.f32 %v597, %v589
          %v602 = vld [vmem:[%s5] sm:$0xff]
          %v603 = vld [vmem:[%s5 + $0x8] sm:$0xff]
          %v604 = vld [vmem:[%s5 + $0x10] sm:$0xff]
          %v605 = vld [vmem:[%s5 + $0x18] sm:$0xff]
          %607 = vset.pattern.permute.xlu0 0
          %608 = vperm.xlu0 %607, %v598
          %v609 = vpop.permute.xlu0 %608
          %612 = vset.pattern.permute.xlu0 0
          %613 = vperm.xlu0 %612, %v599
          %v614 = vpop.permute.xlu0 %613
          %617 = vset.pattern.permute.xlu0 0
          %618 = vperm.xlu0 %617, %v600
          %v619 = vpop.permute.xlu0 %618
          %622 = vset.pattern.permute.xlu0 0
          %623 = vperm.xlu0 %622, %v601
          %v624 = vpop.permute.xlu0 %623
          %v626 = vmul.f32 %v609, %v602
          %v627 = vmul.f32 %v614, %v603
          %v628 = vmul.f32 %v619, %v604
          %v629 = vmul.f32 %v624, %v605
          %vm630 = vcmask 261120
          %v631 = vsel %vm630, %v626, 0.0
          %v632 = vsel %vm630, %v627, 0.0
          %v633 = vadd.f32 %v631, %v632
          %v634 = vsel %vm630, %v628, 0.0
          %v635 = vadd.f32 %v633, %v634
          %v636 = vsel %vm630, %v629, 0.0
          %v637 = vadd.f32 %v635, %v636
          %v638 = vrot.slane %v637, 4
          %v639 = vadd.f32 %v637, %v638
          %v640 = vrot.slane %v639, 2
          %v641 = vadd.f32 %v639, %v640
          %v642 = vrot.slane %v641, 1
          %v643 = vadd.f32 %v641, %v642
          %v644 = vld [vmem:[%s6] sm:$0x1]
          %v645 = vadd.f32 %v643, %v644
          %v646 = vmax.f32 %v645, 0.0
          %v647 = vld [vmem:[%s7] sm:$0x1]
          %v648 = vmul.f32 %v646, %v647
          %vm649 = vcmask 253952
          %v650 = vsel %vm649, %v648, 0.0
          %651 = vadd.xlane.f32.xlu0 %v650
          %v652 = vpop.xlane.xlu0 %651
          %v653 = vld [vmem:[#allocation5] sm:$0x1]
          %v654 = vadd.f32 %v652, %v653
          %656 = vset.pattern.permute.xlu0 0
          %657 = vperm.xlu0 %656, %v654
          %v658 = vpop.permute.xlu0 %657
          %660 = vst [vmem:[%s328] sm:$0x1] %v658
        $region60: #{tpu_custom_call.1} parent=51 // pred_fallthru
          _
        %s661 = sand.u32 %s228, 1
        %s662 = scalar_lea.sflag [#allocation7], %s661
        %s663 = sand.u32 %s228, 1
        %s664 = scalar_lea.vmem [#allocation6], %s663
        // Predicated region
        $region61: #{tpu_custom_call.1} parent=51 // pred_check
          %p665 = pneg %p238
        $region62: #{tpu_custom_call.1} parent=51 // pred_check_branch
          %667 = sbr.rel (%p665) target = $region64
        $region63: #{tpu_custom_call.1} parent=51 // pred_region
          %669 = vsyncadd %s662, 0
          %s670 = scalar_lea.hbm %s9, %s37
          %s672 = sshll.u32 %s664, 4
          %s673 = int_to_ptr.vmem [resolvable:$true] %s672
          %s674 = sshll.u32 %s670, 4
          %s675 = int_to_ptr.hbm [resolvable:$true] %s674
          %677 = dma.vmem_to_hbm [thread:$0]  %s673, 16, %s675, %s662
        $region64: #{tpu_custom_call.1} parent=51 // pred_fallthru
          _
      $region52: #{tpu_custom_call.1} parent=5 // pred_fallthru
        _
      %p678 = scmp.le.s32.totalorder 2, %s28
      // Predicated region
      $region65: #{tpu_custom_call.1} parent=5 // pred_check
        %p679 = pneg %p678
      $region66: #{tpu_custom_call.1} parent=5 // pred_check_branch
        %681 = sbr.rel (%p679) target = $region68
      $region67: #{tpu_custom_call.1} parent=5 // pred_region
        %s682 = ssub.s32 %s28, 2
        // Predicated region
        $region69: #{tpu_custom_call.1} parent=67 // pred_check
          %p683 = pneg %p244
        $region70: #{tpu_custom_call.1} parent=67 // pred_check_branch
          %685 = sbr.rel (%p683) target = $region72
        $region71: #{tpu_custom_call.1} parent=67 // pred_region
          %s686 = sand.u32 %s229, 1
          %s687 = scalar_lea.sflag [#allocation7], %s686
          %s688 = sand.u32 %s229, 1
          %s689 = scalar_lea.vmem [#allocation6], %s688
          %691 = dma.done %s687, 16
        $region72: #{tpu_custom_call.1} parent=67 // pred_fallthru
          _
      $region68: #{tpu_custom_call.1} parent=5 // pred_fallthru
        _
    $region6: #{tpu_custom_call.1} parent=1 // loop_footer
      %s32 = sadd.s32 1, %s28
    $region7: #{tpu_custom_call.1} parent=1 // loop_footer_branch
      %27 = sbr.rel target = $region3
    $region8: #{tpu_custom_call.1} parent=1 // loop_exit
      _
    %692 = vsyncpa [#allocation7], 1
    %s693 = scalar_lea.sflag [#allocation7], 1
    %694 = vsyncpa %s693, 1

</llo_original>
